<compile_context>
chip_gen: v6e
topology: v6e:2x2x1
jax: 0.10.0
libtpu: 0.0.40
codegen_flags: <defaults>
</compile_context>

<pallas_src>
import functools

import jax
import jax.numpy as jnp
from jax import lax
from jax.experimental import pallas as pl
from jax.experimental.pallas import tpu as pltpu


def bert_self_output_kernel(x_ref, res_ref, w_ref, b_ref, g_ref, beta_ref, o_ref, *, eps):
    # x_ref:    (TM, H_in)   hidden_states rows, native matmul dtype (bf16 by default)
    # res_ref:  (TM, H)      residual (input_tensor) rows, original dtype
    # w_ref:    (H_out, H_in) dense weight in PyTorch (out, in) layout
    # b_ref/g_ref/beta_ref: (1, H) f32 bias / LN gamma / LN beta (pre-cast in wrapper)
    x = x_ref[...]
    w = w_ref[...]

    # Dense: contract x's hidden dim with the weight's `in` dim -> (TM, H_out) == x @ W^T.
    # MXU sees the native (bf16) operands; accumulation is f32.
    acc = lax.dot_general(
        x, w,
        dimension_numbers=(((1,), (1,)), ((), ())),
        preferred_element_type=jnp.float32)

    # Dropout: inference mode -> identity.
    # TODO(synk): training-mode dropout would use pltpu.prng_seed / prng_random_bits.

    # Fused bias + residual epilogue (single f32 VPU pass on the MXU result).
    h = acc + (res_ref[...].astype(jnp.float32) + b_ref[...])

    # LayerNorm over the hidden (lane) axis, in f32.
    mean = jnp.mean(h, axis=-1, keepdims=True)
    centered = h - mean
    var = jnp.mean(centered * centered, axis=-1, keepdims=True)
    inv = lax.rsqrt(var + eps)

    o_ref[...] = (centered * inv * g_ref[...] + beta_ref[...]).astype(o_ref.dtype)


def _physical_vmem_bytes():
    """Trace-time VMEM capacity query; falls back to the most conservative budget (v7x)."""
    try:
        info = pltpu.get_tpu_info()
        cap = getattr(info, "vmem_capacity_bytes", None)
        if cap:
            return int(cap)
    except Exception:
        pass
    return 64 * 1024 * 1024


def bert_self_output(hidden_states, input_tensor, weight, bias, gamma, beta,
                     *, eps=1e-12, tm=None, matmul_dtype=jnp.bfloat16):
    """hidden_states, input_tensor: (B, S, H). weight: (H, H) in PyTorch (out, in) layout.

    matmul_dtype: dtype fed to the MXU for x and W (default bf16; cast is a no-op if the
    caller already provides that dtype; pass jnp.float32 for a bit-exact-to-f32 path or
    None to use the input dtypes as-is).  LayerNorm math is always f32.
    """
    B, S, H = hidden_states.shape
    T = B * S

    x2 = hidden_states.reshape(T, H)
    r2 = input_tensor.reshape(T, H)

    mm_dtype = jnp.dtype(matmul_dtype) if matmul_dtype is not None else jnp.dtype(x2.dtype)
    if x2.dtype != mm_dtype:
        x2 = x2.astype(mm_dtype)
    if weight.dtype != mm_dtype:
        weight = weight.astype(mm_dtype)

    # Small params: cast to f32 once here (hoisted out of the kernel / grid loop).
    b2 = bias.reshape(1, H).astype(jnp.float32)
    g2 = gamma.reshape(1, H).astype(jnp.float32)
    bt2 = beta.reshape(1, H).astype(jnp.float32)

    out_dtype = hidden_states.dtype
    x_bytes = mm_dtype.itemsize
    r_bytes = jnp.dtype(r2.dtype).itemsize
    o_bytes = jnp.dtype(out_dtype).itemsize
    w_bytes = mm_dtype.itemsize

    # Generation-aware VMEM budget: 128 MiB (v5e/v6e) vs 64 MiB per TC (v7x); keep 25%
    # headroom for compiler-internal scratch, semaphores and the pipeline's own buffers.
    physical_vmem = _physical_vmem_bytes()
    vmem_cap = (physical_vmem * 3) // 4

    # Row tile: bigger tiles on 128-MiB parts amortize per-grid-step overhead; alignment
    # follows sublane packing of the matmul dtype (f32 -> 8 rows, bf16 -> 16, 8-bit -> 32).
    if tm is None:
        tm = 512 if physical_vmem >= 96 * 1024 * 1024 else 256
    align = max(8, 32 // x_bytes)
    tm = min(tm, pl.cdiv(T, align) * align)
    tm = max(align, (tm // align) * align)

    # No padding: Pallas handles the partial tail block (OOB rows read garbage, never
    # stored; LN is per-row so valid rows are unaffected).
    grid = (pl.cdiv(T, tm),)

    # Rough VMEM footprint: resident weight (pipeline allocates 2 buffers even for a
    # constant index_map), double-buffered (x, res, out) tiles, f32 epilogue temporaries.
    vmem_est = (2 * H * H * w_bytes
                + 2 * tm * H * (x_bytes + r_bytes + o_bytes)
                + 4 * tm * H * 4
                + 8 * H * 4)
    vmem_limit = int(min(max(int(1.5 * vmem_est), 32 * 1024 * 1024), vmem_cap))

    cost = pl.CostEstimate(
        flops=2 * T * H * H,
        transcendentals=T,  # one rsqrt per row
        bytes_accessed=(T * H * (x_bytes + r_bytes + o_bytes)   # x, residual, output
                        + H * H * w_bytes                       # weight (read once)
                        + 3 * H * 4))                           # bias / gamma / beta

    kernel = functools.partial(bert_self_output_kernel, eps=eps)

    out = pl.pallas_call(
        kernel,
        out_shape=jax.ShapeDtypeStruct((T, H), out_dtype),
        grid_spec=pltpu.PrefetchScalarGridSpec(
            num_scalar_prefetch=0,
            grid=grid,
            in_specs=[
                pl.BlockSpec((tm, H), lambda i: (i, 0)),   # hidden_states rows
                pl.BlockSpec((tm, H), lambda i: (i, 0)),   # residual rows
                pl.BlockSpec((H, H), lambda i: (0, 0)),    # weight (constant idx -> resident)
                pl.BlockSpec((1, H), lambda i: (0, 0)),    # bias (f32)
                pl.BlockSpec((1, H), lambda i: (0, 0)),    # gamma (f32)
                pl.BlockSpec((1, H), lambda i: (0, 0)),    # beta (f32)
            ],
            out_specs=pl.BlockSpec((tm, H), lambda i: (i, 0)),
        ),
        compiler_params=pltpu.CompilerParams(
            dimension_semantics=("parallel",),   # row tiles are independent (megacore-shardable)
            vmem_limit_bytes=vmem_limit),
        cost_estimate=cost,
    )(x2, r2, weight, b2, g2, bt2)

    return out.reshape(B, S, H)


def reference(hidden_states, input_tensor, weight, bias, gamma, beta, eps=1e-12):
    h = jnp.einsum("bsh,oh->bso", hidden_states, weight) + bias
    h = h + input_tensor
    mean = jnp.mean(h, axis=-1, keepdims=True)
    var = jnp.mean((h - mean) ** 2, axis=-1, keepdims=True)
    return (h - mean) * jax.lax.rsqrt(var + eps) * gamma + beta


if __name__ == "__main__":
    # Small config: batch=2, seq=8, hidden=128 (lane-aligned)
    B, S, H = 2, 8, 128
    eps = 1e-12

    key = jax.random.PRNGKey(0)
    k1, k2, k3, k4 = jax.random.split(key, 4)
    hidden_states = jax.random.normal(k1, (B, S, H), dtype=jnp.float32)
    input_tensor = jax.random.normal(k2, (B, S, H), dtype=jnp.float32)
    # Deterministic parameter init (nn.Linear-like scale), PyTorch (out, in) layout.
    weight = jax.random.normal(k3, (H, H), dtype=jnp.float32) * (1.0 / jnp.sqrt(H))
    bias = jax.random.normal(k4, (H,), dtype=jnp.float32) * 0.02
    gamma = jnp.ones((H,), dtype=jnp.float32)
    beta = jnp.zeros((H,), dtype=jnp.float32)

    ref = reference(hidden_states, input_tensor, weight, bias, gamma, beta, eps=eps)

    # Strict check: f32 MXU path.
    out_f32 = bert_self_output(hidden_states, input_tensor, weight, bias, gamma, beta,
                               eps=eps, matmul_dtype=jnp.float32)
    out_f32 = jax.block_until_ready(out_f32)
    assert out_f32.shape == (B, S, H)
    assert jnp.allclose(out_f32, ref, atol=1e-4, rtol=1e-4), \
        f"f32 path max err {jnp.max(jnp.abs(out_f32 - ref))}"

    # Default path: bf16 MXU operands, f32 accumulation + f32 LayerNorm (looser tolerance).
    out_bf16 = bert_self_output(hidden_states, input_tensor, weight, bias, gamma, beta, eps=eps)
    out_bf16 = jax.block_until_ready(out_bf16)
    assert out_bf16.shape == (B, S, H)
    assert jnp.allclose(out_bf16, ref, atol=2e-2, rtol=2e-2), \
        f"bf16 path max err {jnp.max(jnp.abs(out_bf16 - ref))}"

    # Partial tail block path (T not a multiple of the row tile; no wrapper-side padding).
    S2 = 5
    hs2 = jax.random.normal(k1, (B, S2, H), dtype=jnp.float32)
    it2 = jax.random.normal(k2, (B, S2, H), dtype=jnp.float32)
    ref2 = reference(hs2, it2, weight, bias, gamma, beta, eps=eps)
    out2 = bert_self_output(hs2, it2, weight, bias, gamma, beta, eps=eps)
    out2 = jax.block_until_ready(out2)
    assert out2.shape == (B, S2, H)
    assert jnp.allclose(out2, ref2, atol=2e-2, rtol=2e-2), \
        f"tail-block max err {jnp.max(jnp.abs(out2 - ref2))}"

    print("KERNEL_OK")
</pallas_src>

<mosaic_0001>
module attributes {stable_mosaic.version = 11 : i64} {
  func.func @bert_self_output_kernel(%arg0: i32, %arg1: memref<16x128xf32, #tpu.memory_space<vmem>>, %arg2: memref<16x128xf32, #tpu.memory_space<vmem>>, %arg3: memref<128x128xf32, #tpu.memory_space<vmem>>, %arg4: memref<1x128xf32, #tpu.memory_space<vmem>>, %arg5: memref<1x128xf32, #tpu.memory_space<vmem>>, %arg6: memref<1x128xf32, #tpu.memory_space<vmem>>, %arg7: memref<16x128xf32, #tpu.memory_space<vmem>>) attributes {dimension_semantics = [#tpu.dimension_semantics<parallel>], iteration_bounds = array<i64: 1>, scalar_prefetch = 0 : i64, scratch_operands = 0 : i64, tpu.core_type = #tpu.core_type<tc>, window_params = [{transform_indices = @transform_0, window_bounds = array<i64: 16, 128>}, {transform_indices = @transform_1, window_bounds = array<i64: 16, 128>}, {pipeline_mode = #tpu.pipeline_mode<synchronous>, transform_indices = @transform_2, window_bounds = array<i64: 128, 128>}, {pipeline_mode = #tpu.pipeline_mode<synchronous>, transform_indices = @transform_3, window_bounds = array<i64: 1, 128>}, {pipeline_mode = #tpu.pipeline_mode<synchronous>, transform_indices = @transform_4, window_bounds = array<i64: 1, 128>}, {pipeline_mode = #tpu.pipeline_mode<synchronous>, transform_indices = @transform_5, window_bounds = array<i64: 1, 128>}, {transform_indices = @transform_6, window_bounds = array<i64: 16, 128>}]} {
    %c0 = arith.constant 0 : index
    %c0_0 = arith.constant 0 : index
    %0 = vector.load %arg1[%c0, %c0_0] : memref<16x128xf32, #tpu.memory_space<vmem>>, vector<16x128xf32>
    %c0_1 = arith.constant 0 : index
    %c0_2 = arith.constant 0 : index
    %1 = vector.load %arg3[%c0_1, %c0_2] : memref<128x128xf32, #tpu.memory_space<vmem>>, vector<128x128xf32>
    %cst = arith.constant dense<0.000000e+00> : vector<16x128xf32>
    %2 = tpu.matmul %0, %1, %cst {dimension_numbers = #tpu.dot_dimension_numbers<[1], [1], [0], [0], [0, 0, 1, 0], [], []>} : vector<16x128xf32>, vector<128x128xf32>, vector<16x128xf32> -> vector<16x128xf32>
    %c0_3 = arith.constant 0 : index
    %c0_4 = arith.constant 0 : index
    %3 = vector.load %arg2[%c0_3, %c0_4] : memref<16x128xf32, #tpu.memory_space<vmem>>, vector<16x128xf32>
    %c0_5 = arith.constant 0 : index
    %c0_6 = arith.constant 0 : index
    %4 = vector.load %arg4[%c0_5, %c0_6] : memref<1x128xf32, #tpu.memory_space<vmem>>, vector<1x128xf32>
    %5 = vector.broadcast %4 : vector<1x128xf32> to vector<16x128xf32>
    %6 = arith.addf %3, %5 : vector<16x128xf32>
    %7 = arith.addf %2, %6 : vector<16x128xf32>
    %cst_7 = arith.constant dense<0.000000e+00> : vector<16xf32>
    %8 = vector.multi_reduction <add>, %7, %cst_7 [1] : vector<16x128xf32> to vector<16xf32>
    %9 = vector.shape_cast %8 : vector<16xf32> to vector<16x1xf32>
    %cst_8 = arith.constant 1.280000e+02 : f32
    %10 = vector.broadcast %cst_8 : f32 to vector<16x1xf32>
    %11 = arith.divf %9, %10 : vector<16x1xf32>
    %12 = vector.broadcast %11 : vector<16x1xf32> to vector<16x128xf32>
    %13 = arith.subf %7, %12 : vector<16x128xf32>
    %14 = arith.mulf %13, %13 : vector<16x128xf32>
    %cst_9 = arith.constant dense<0.000000e+00> : vector<16xf32>
    %15 = vector.multi_reduction <add>, %14, %cst_9 [1] : vector<16x128xf32> to vector<16xf32>
    %16 = vector.shape_cast %15 : vector<16xf32> to vector<16x1xf32>
    %cst_10 = arith.constant 1.280000e+02 : f32
    %17 = vector.broadcast %cst_10 : f32 to vector<16x1xf32>
    %18 = arith.divf %16, %17 : vector<16x1xf32>
    %cst_11 = arith.constant 9.99999996E-13 : f32
    %19 = vector.broadcast %cst_11 : f32 to vector<16x1xf32>
    %20 = arith.addf %18, %19 : vector<16x1xf32>
    %21 = math.rsqrt %20 : vector<16x1xf32>
    %22 = vector.broadcast %21 : vector<16x1xf32> to vector<16x128xf32>
    %23 = arith.mulf %13, %22 : vector<16x128xf32>
    %c0_12 = arith.constant 0 : index
    %c0_13 = arith.constant 0 : index
    %24 = vector.load %arg5[%c0_12, %c0_13] : memref<1x128xf32, #tpu.memory_space<vmem>>, vector<1x128xf32>
    %25 = vector.broadcast %24 : vector<1x128xf32> to vector<16x128xf32>
    %26 = arith.mulf %23, %25 : vector<16x128xf32>
    %c0_14 = arith.constant 0 : index
    %c0_15 = arith.constant 0 : index
    %27 = vector.load %arg6[%c0_14, %c0_15] : memref<1x128xf32, #tpu.memory_space<vmem>>, vector<1x128xf32>
    %28 = vector.broadcast %27 : vector<1x128xf32> to vector<16x128xf32>
    %29 = arith.addf %26, %28 : vector<16x128xf32>
    %c0_16 = arith.constant 0 : index
    %c0_17 = arith.constant 0 : index
    %30 = vector.load %arg7[%c0_16, %c0_17] : memref<16x128xf32, #tpu.memory_space<vmem>>, vector<16x128xf32>
    tpu.vector_store %arg7[%c0_16, %c0_17], %29 {strides = array<i32>} : memref<16x128xf32, #tpu.memory_space<vmem>>, vector<16x128xf32>,
    return
  }
  func.func @transform_0(%arg0: i32) -> (i32, i32) {
    %c0_i32 = arith.constant 0 : i32
    %c0_i32_0 = arith.constant 0 : i32
    return %arg0, %c0_i32 : i32, i32
  }
  func.func @transform_1(%arg0: i32) -> (i32, i32) {
    %c0_i32 = arith.constant 0 : i32
    %c0_i32_0 = arith.constant 0 : i32
    return %arg0, %c0_i32 : i32, i32
  }
  func.func @transform_2(%arg0: i32) -> (i32, i32) {
    %c0_i32 = arith.constant 0 : i32
    %c0_i32_0 = arith.constant 0 : i32
    %c0_i32_1 = arith.constant 0 : i32
    return %c0_i32, %c0_i32_0 : i32, i32
  }
  func.func @transform_3(%arg0: i32) -> (i32, i32) {
    %c0_i32 = arith.constant 0 : i32
    %c0_i32_0 = arith.constant 0 : i32
    %c0_i32_1 = arith.constant 0 : i32
    return %c0_i32, %c0_i32_0 : i32, i32
  }
  func.func @transform_4(%arg0: i32) -> (i32, i32) {
    %c0_i32 = arith.constant 0 : i32
    %c0_i32_0 = arith.constant 0 : i32
    %c0_i32_1 = arith.constant 0 : i32
    return %c0_i32, %c0_i32_0 : i32, i32
  }
  func.func @transform_5(%arg0: i32) -> (i32, i32) {
    %c0_i32 = arith.constant 0 : i32
    %c0_i32_0 = arith.constant 0 : i32
    %c0_i32_1 = arith.constant 0 : i32
    return %c0_i32, %c0_i32_0 : i32, i32
  }
  func.func @transform_6(%arg0: i32) -> (i32, i32) {
    %c0_i32 = arith.constant 0 : i32
    %c0_i32_0 = arith.constant 0 : i32
    return %arg0, %c0_i32 : i32, i32
  }
}

</mosaic_0001>

<llo_original>
// kernel: tpu_custom_call.1
$region0: #{tpu_custom_call.1}
  #allocation0 [shape = 'u32[]', space=smem, size = 0x4, offset = 0x4, fixed_abs, tag = 'smem constant byte address 0x4 - core index']
  #allocation1 [shape = 'u32[144,128]{1,0:T(1,128)}', space=vmem, size = 0x12000, scoped, tag = 'internal scratch']
  %s0 = inlined_call_operand.hbm [shape: f32[16,128], index: 0, kind: input, shape index: {}]
  %s1 = inlined_call_operand.hbm [shape: f32[16,128], index: 1, kind: input, shape index: {}]
  %s2 = inlined_call_operand.hbm [shape: f32[128,128], index: 2, kind: input, shape index: {}]
  %s3 = inlined_call_operand.vmem [shape: f32[1,128], index: 3, kind: input, shape index: {}]
  %s4 = inlined_call_operand.vmem [shape: f32[1,128], index: 4, kind: input, shape index: {}]
  %s5 = inlined_call_operand.vmem [shape: f32[1,128], index: 5, kind: input, shape index: {}]
  %s6 = inlined_call_operand.hbm [shape: f32[16,128], index: 6, kind: output, shape index: {}]
  %s7 = sld [smem:[#allocation0]]
  $region46: #{tpu_custom_call.1} parent=0
    _
  %s9 = ssub.s32 1, %s7
  %s10 = scalar_select 0, %s9, %s7
  $region1: #{tpu_custom_call.1} parent=0
    #allocation2 [shape = 'u8[8192]{0}', space=vmem, size = 0x2000, scoped, tag = 'input window, operand 0, single buffered']
    #allocation3 [shape = 's32[1]{0}', space=sflag, size = 0x4, scoped, tag = 'scoped memory for tpu_custom_call.1']
    #allocation4 [shape = 's32[1]{0}', space=sflag, size = 0x4, scoped, tag = 'scoped memory for tpu_custom_call.1']
    #allocation5 [shape = 'u8[8192]{0}', space=vmem, size = 0x2000, scoped, tag = 'input window, operand 1, single buffered']
    #allocation6 [shape = 's32[1]{0}', space=sflag, size = 0x4, scoped, tag = 'scoped memory for tpu_custom_call.1']
    #allocation7 [shape = 'u8[65536]{0}', space=vmem, size = 0x10000, scoped, tag = 'input window, operand 2, single buffered']
    #allocation8 [shape = 'u8[8192]{0}', space=vmem, size = 0x2000, scoped, tag = 'output window, operand 0, single buffered']
    %11 = vsyncpa [#allocation3], 0
    %12 = vsyncpa [#allocation6], 0
    %13 = vsyncpa [#allocation4], 0
    // Predicated region
    $region2: #{tpu_custom_call.1} parent=1 // pred_check
      _
    $region3: #{tpu_custom_call.1} parent=1 // pred_check_branch
      %15 = sbr.rel (0) target = $region5
    $region4: #{tpu_custom_call.1} parent=1 // pred_region
      %s17 = ssub.s32 256, 256
      %18 = vsyncadd [#allocation3], %s17
      %s19 = sshll.u32 [#allocation2], 4
      %s20 = int_to_ptr.vmem [resolvable:$true] %s19
      %25 = dma.hbm_to_vmem [thread:$0]  %s0, 256, %s20, [#allocation3], 128, 128, 8
    $region5: #{tpu_custom_call.1} parent=1 // pred_fallthru
      _
    // Predicated region
    $region6: #{tpu_custom_call.1} parent=1 // pred_check
      _
    $region7: #{tpu_custom_call.1} parent=1 // pred_check_branch
      %27 = sbr.rel (0) target = $region9
    $region8: #{tpu_custom_call.1} parent=1 // pred_region
      %s29 = ssub.s32 256, 256
      %30 = vsyncadd [#allocation6], %s29
      %s31 = sshll.u32 [#allocation5], 4
      %s32 = int_to_ptr.vmem [resolvable:$true] %s31
      %37 = dma.hbm_to_vmem [thread:$0]  %s1, 256, %s32, [#allocation6], 128, 128, 8
    $region9: #{tpu_custom_call.1} parent=1 // pred_fallthru
      _
    // Predicated region
    $region10: #{tpu_custom_call.1} parent=1 // pred_check
      _
    $region11: #{tpu_custom_call.1} parent=1 // pred_check_branch
      %39 = sbr.rel (0) target = $region13
    $region12: #{tpu_custom_call.1} parent=1 // pred_region
      %s41 = ssub.s32 2048, 2048
      %42 = vsyncadd [#allocation6], %s41
      %s43 = sshll.u32 [#allocation7], 4
      %s44 = int_to_ptr.vmem [resolvable:$true] %s43
      %49 = dma.hbm_to_vmem [thread:$0]  %s2, 2048, %s44, [#allocation6], 128, 128, 8
    $region13: #{tpu_custom_call.1} parent=1 // pred_fallthru
      _
    // Predicated region
    $region14: #{tpu_custom_call.1} parent=1 // pred_check
      _
    $region15: #{tpu_custom_call.1} parent=1 // pred_check_branch
      %51 = sbr.rel (0) target = $region17
    $region16: #{tpu_custom_call.1} parent=1 // pred_region
      _
    $region17: #{tpu_custom_call.1} parent=1 // pred_fallthru
      _
    // Predicated region
    $region18: #{tpu_custom_call.1} parent=1 // pred_check
      _
    $region19: #{tpu_custom_call.1} parent=1 // pred_check_branch
      %53 = sbr.rel (0) target = $region21
    $region20: #{tpu_custom_call.1} parent=1 // pred_region
      _
    $region21: #{tpu_custom_call.1} parent=1 // pred_fallthru
      _
    // Predicated region
    $region22: #{tpu_custom_call.1} parent=1 // pred_check
      _
    $region23: #{tpu_custom_call.1} parent=1 // pred_check_branch
      %55 = sbr.rel (0) target = $region25
    $region24: #{tpu_custom_call.1} parent=1 // pred_region
      _
    $region25: #{tpu_custom_call.1} parent=1 // pred_fallthru
      _
    // Predicated region
    $region26: #{tpu_custom_call.1} parent=1 // pred_check
      _
    $region27: #{tpu_custom_call.1} parent=1 // pred_check_branch
      %57 = sbr.rel (0) target = $region29
    $region28: #{tpu_custom_call.1} parent=1 // pred_region
      %58 = dma.done [#allocation3], 256
    $region29: #{tpu_custom_call.1} parent=1 // pred_fallthru
      _
    // Predicated region
    $region30: #{tpu_custom_call.1} parent=1 // pred_check
      _
    $region31: #{tpu_custom_call.1} parent=1 // pred_check_branch
      %60 = sbr.rel (0) target = $region33
    $region32: #{tpu_custom_call.1} parent=1 // pred_region
      %61 = dma.done [#allocation6], 256
    $region33: #{tpu_custom_call.1} parent=1 // pred_fallthru
      _
    // Predicated region
    $region34: #{tpu_custom_call.1} parent=1 // pred_check
      _
    $region35: #{tpu_custom_call.1} parent=1 // pred_check_branch
      %63 = sbr.rel (0) target = $region37
    $region36: #{tpu_custom_call.1} parent=1 // pred_region
      %64 = dma.done [#allocation6], 2048
    $region37: #{tpu_custom_call.1} parent=1 // pred_fallthru
      _
    %v65 = vld [vmem:[#allocation2] sm:$0xff]
    %v66 = vld [vmem:[#allocation2 + $0x8] sm:$0xff]
    %v67 = vld [vmem:[#allocation7] sm:$0xff]
    %v68 = vld [vmem:[#allocation7 + $0x8] sm:$0xff]
    %v69 = vld [vmem:[#allocation7 + $0x10] sm:$0xff]
    %v70 = vld [vmem:[#allocation7 + $0x18] sm:$0xff]
    %v71 = vld [vmem:[#allocation7 + $0x20] sm:$0xff]
    %v72 = vld [vmem:[#allocation7 + $0x28] sm:$0xff]
    %v73 = vld [vmem:[#allocation7 + $0x30] sm:$0xff]
    %v74 = vld [vmem:[#allocation7 + $0x38] sm:$0xff]
    %v75 = vld [vmem:[#allocation7 + $0x40] sm:$0xff]
    %v76 = vld [vmem:[#allocation7 + $0x48] sm:$0xff]
    %v77 = vld [vmem:[#allocation7 + $0x50] sm:$0xff]
    %v78 = vld [vmem:[#allocation7 + $0x58] sm:$0xff]
    %v79 = vld [vmem:[#allocation7 + $0x60] sm:$0xff]
    %v80 = vld [vmem:[#allocation7 + $0x68] sm:$0xff]
    %v81 = vld [vmem:[#allocation7 + $0x70] sm:$0xff]
    %v82 = vld [vmem:[#allocation7 + $0x78] sm:$0xff]
    %v83 = vld [vmem:[#allocation5] sm:$0xff]
    %v84 = vld [vmem:[#allocation5 + $0x8] sm:$0xff]
    %v85 = vld [vmem:[%s3] sm:$0x1]
    %v87 = vlaneseq
    %v88 = vshrl.u32 %v87, 7
    %v89 = vsub.s32 0, %v88
    %v90 = vrot.slane %v85, %v89
    %v92 = vadd.f32 %v83, %v90
    %v93 = vadd.f32 %v84, %v90
    %94 = vmatprep.subr.mxu0 0.0
    %95 = vmatpush1.xpose.msra.mxu0 %v82
    %96 = vmatprep.subr.mxu0 0.0
    %97 = vmatpush1.xpose.msra.mxu0 %v81
    %98 = vmatprep.subr.mxu0 0.0
    %99 = vmatpush1.xpose.msra.mxu0 %v80
    %100 = vmatprep.subr.mxu0 0.0
    %101 = vmatpush1.xpose.msra.mxu0 %v79
    %102 = vmatprep.subr.mxu0 0.0
    %103 = vmatpush1.xpose.msra.mxu0 %v78
    %104 = vmatprep.subr.mxu0 0.0
    %105 = vmatpush1.xpose.msra.mxu0 %v77
    %106 = vmatprep.subr.mxu0 0.0
    %107 = vmatpush1.xpose.msra.mxu0 %v76
    %108 = vmatprep.subr.mxu0 0.0
    %109 = vmatpush1.xpose.msra.mxu0 %v75
    %110 = vmatprep.subr.mxu0 0.0
    %111 = vmatpush1.xpose.msra.mxu0 %v74
    %112 = vmatprep.subr.mxu0 0.0
    %113 = vmatpush1.xpose.msra.mxu0 %v73
    %114 = vmatprep.subr.mxu0 0.0
    %115 = vmatpush1.xpose.msra.mxu0 %v72
    %116 = vmatprep.subr.mxu0 0.0
    %117 = vmatpush1.xpose.msra.mxu0 %v71
    %118 = vmatprep.subr.mxu0 0.0
    %119 = vmatpush1.xpose.msra.mxu0 %v70
    %120 = vmatprep.subr.mxu0 0.0
    %121 = vmatpush1.xpose.msra.mxu0 %v69
    %122 = vmatprep.subr.mxu0 0.0
    %123 = vmatpush1.xpose.msra.mxu0 %v68
    %124 = vmatprep.subr.mxu0 0.0
    %125 = vmatpush1.xpose.msra.mxu0 %v67
    %126 = vmatprep.subr.mxu0 0.0
    %127 = vmatpush2.xpose.msra.mxu0 0.0
    %128 = vmatprep.subr.mxu0 0.0
    %129 = vmatpush2.xpose.msra.mxu0 0.0
    %130 = vmatprep.subr.mxu0 0.0
    %131 = vmatpush2.xpose.msra.mxu0 0.0
    %132 = vmatprep.subr.mxu0 0.0
    %133 = vmatpush2.xpose.msra.mxu0 0.0
    %134 = vmatprep.subr.mxu0 0.0
    %135 = vmatpush2.xpose.msra.mxu0 0.0
    %136 = vmatprep.subr.mxu0 0.0
    %137 = vmatpush2.xpose.msra.mxu0 0.0
    %138 = vmatprep.subr.mxu0 0.0
    %139 = vmatpush2.xpose.msra.mxu0 0.0
    %140 = vmatprep.subr.mxu0 0.0
    %141 = vmatpush2.xpose.msra.mxu0 0.0
    %142 = vmatprep.subr.mxu0 0.0
    %143 = vmatpush2.xpose.msra.mxu0 0.0
    %144 = vmatprep.subr.mxu0 0.0
    %145 = vmatpush2.xpose.msra.mxu0 0.0
    %146 = vmatprep.subr.mxu0 0.0
    %147 = vmatpush2.xpose.msra.mxu0 0.0
    %148 = vmatprep.subr.mxu0 0.0
    %149 = vmatpush2.xpose.msra.mxu0 0.0
    %150 = vmatprep.subr.mxu0 0.0
    %151 = vmatpush2.xpose.msra.mxu0 0.0
    %152 = vmatprep.subr.mxu0 0.0
    %153 = vmatpush2.xpose.msra.mxu0 0.0
    %154 = vmatprep.subr.mxu0 0.0
    %155 = vmatpush2.xpose.msra.mxu0 0.0
    %156 = vmatprep.subr.mxu0 0.0
    %157 = vmatpush2.xpose.msra.mxu0 0.0
    %158 = vmatprep.mubr.f32.mxu0 0.0
    %159 = vmatmul.mubr.f32.gmra.mxu0 %v65
    %v160 = vpop.f32.mrf.mxu0
    %v161 = vadd.f32 %v92, %v160
    %v162 = vpop.f32.mrf.mxu0
    %163 = vmatprep.mubr.f32.mxu0 0.0
    %164 = vmatmul.mubr.f32.gmra.mxu0 %v66
    %v165 = vpop.f32.mrf.mxu0
    %v166 = vadd.f32 %v93, %v165
    %v167 = vpop.f32.mrf.mxu0
    %168 = vdwg.mxu0
    %169 = vadd.xlane.f32.xlu0 %v161
    %v170 = vpop.xlane.xlu0 %169
    %171 = vadd.xlane.f32.xlu0 %v166
    %v172 = vpop.xlane.xlu0 %171
    %v173 = vrcp.pop 128.0
    %v174 = vmul.f32 %v170, %v173
    %v175 = vmul.f32 %v172, %v173
    %v176 = vsub.f32 %v161, %v174
    %v177 = vsub.f32 %v166, %v175
    %v178 = vmul.f32 %v176, %v176
    %v179 = vmul.f32 %v177, %v177
    %180 = vadd.xlane.f32.xlu0 %v178
    %v181 = vpop.xlane.xlu0 %180
    %182 = vadd.xlane.f32.xlu0 %v179
    %v183 = vpop.xlane.xlu0 %182
    %v184 = vmul.f32 %v181, %v173
    %v185 = vmul.f32 %v183, %v173
    %v186 = vadd.f32 %v184, 1e-12
    %v187 = vadd.f32 %v185, 1e-12
    %v188 = vrsqrt.pop %v186
    %v189 = vrsqrt.pop %v187
    %v190 = vmul.f32 %v176, %v188
    %v191 = vmul.f32 %v177, %v189
    %v192 = vld [vmem:[%s4] sm:$0x1]
    %v194 = vlaneseq
    %v195 = vshrl.u32 %v194, 7
    %v196 = vsub.s32 0, %v195
    %v197 = vrot.slane %v192, %v196
    %v199 = vmul.f32 %v190, %v197
    %v200 = vmul.f32 %v191, %v197
    %v201 = vld [vmem:[%s5] sm:$0x1]
    %v203 = vlaneseq
    %v204 = vshrl.u32 %v203, 7
    %v205 = vsub.s32 0, %v204
    %v206 = vrot.slane %v201, %v205
    %v208 = vadd.f32 %v199, %v206
    %v209 = vadd.f32 %v200, %v206
    %210 = vst [vmem:[#allocation8] sm:$0xff] %v208
    %211 = vst [vmem:[#allocation8 + $0x8] sm:$0xff] %v209
    // Predicated region
    $region38: #{tpu_custom_call.1} parent=1 // pred_check
      _
    $region39: #{tpu_custom_call.1} parent=1 // pred_check_branch
      %213 = sbr.rel (0) target = $region41
    $region40: #{tpu_custom_call.1} parent=1 // pred_region
      %s215 = ssub.s32 256, 256
      %216 = vsyncadd [#allocation4], %s215
      %s217 = sshll.u32 [#allocation8], 4
      %s218 = int_to_ptr.vmem [resolvable:$true] %s217
      %223 = dma.vmem_to_hbm [thread:$0]  %s218, 256, %s6, [#allocation4], 128, 128, 8
    $region41: #{tpu_custom_call.1} parent=1 // pred_fallthru
      _
    // Predicated region
    $region42: #{tpu_custom_call.1} parent=1 // pred_check
      _
    $region43: #{tpu_custom_call.1} parent=1 // pred_check_branch
      %225 = sbr.rel (0) target = $region45
    $region44: #{tpu_custom_call.1} parent=1 // pred_region
      %226 = dma.done [#allocation4], 256
    $region45: #{tpu_custom_call.1} parent=1 // pred_fallthru
      _
    %227 = vsyncpa [#allocation3], 1
    %228 = vsyncpa [#allocation6], 1
    %229 = vsyncpa [#allocation4], 1

</llo_original>
